<compile_context>
chip_gen: v7x
topology: tpu7x:2x2x1
jax: 0.10.0
libtpu: 0.0.40
codegen_flags: <defaults>
</compile_context>

<pallas_src>
import functools

import jax
import jax.numpy as jnp
import numpy as np
from jax import lax
from jax.experimental import pallas as pl
from jax.experimental.pallas import tpu as pltpu


def _round_up(n, m):
    return ((n + m - 1) // m) * m


def weight_norm(v, g):
    """torch.nn.utils.weight_norm with dim=0: w = g * v / ||v||_per_out_channel."""
    # v: (Cout, Cin, KH, KW), g: (Cout,)
    norm = jnp.sqrt(jnp.sum(v * v, axis=(1, 2, 3), keepdims=True))
    return g[:, None, None, None] * v / norm


def _build_tap_mask(H, W, KH, KW, C, images):
    """Static (KH*KW*C, images*H*W) 0/1 f32 'same'-padding validity mask.

    Row block t (C rows) is the boundary mask of tap t, already replicated
    across the C channel rows and tiled over `images` along the lane axis, so
    in-kernel masking is a plain element-wise multiply (no iota/compare chains,
    no sublane broadcast).  The same mask also zeroes every position whose
    lane-axis roll would wrap across an image boundary.
    """
    hh, ww = np.meshgrid(np.arange(H), np.arange(W), indexing="ij")
    hh = hh.reshape(-1)
    ww = ww.reshape(-1)
    ph, pw = (KH - 1) // 2, (KW - 1) // 2
    blocks = []
    for kh in range(KH):
        dh = kh - ph
        for kw in range(KW):
            dw = kw - pw
            ok = ((hh + dh >= 0) & (hh + dh < H) &
                  (ww + dw >= 0) & (ww + dw < W)).astype(np.float32)
            row = np.tile(ok, images)                         # (images*H*W,)
            blocks.append(np.broadcast_to(row, (C, row.size)))
    return jnp.asarray(np.concatenate(blocks, axis=0))


def _double_conv_kernel(x_ref, w1_ref, b1_ref, w2_ref, b2_ref, mask_ref,
                        o_ref, col_ref, *, W, KH, KW, C):
    """One grid step = the full double conv for a group of whole images.

    x_ref   : (C, L)         channel-major, lane-dense activations (L = imgs*H*W)
    w1_ref  : (C, KH*KW*C)   weight-normalized, channel-padded conv1 weights
    b1_ref  : (C, 1)
    w2_ref  : (Cout, KH*KW*C)
    b2_ref  : (Cout, 1)
    mask_ref: (KH*KW*C, L)   precomputed 0/1 tap masks
    o_ref   : (Cout, L)
    col_ref : (KH*KW*C, L)   VMEM scratch im2col matrix (shared by both convs)
    """
    L = col_ref.shape[-1]
    ph, pw = (KH - 1) // 2, (KW - 1) // 2

    def im2col(x):
        # Each tap: static lane roll (XLU) * precomputed mask (VPU), written
        # straight into its 8-sublane-aligned scratch slot (bounded live range).
        t = 0
        for kh in range(KH):
            dh = kh - ph
            for kw in range(KW):
                dw = kw - pw
                rows = pl.ds(t * C, C)
                if dh == 0 and dw == 0:
                    col_ref[rows, :] = x
                else:
                    shift = (-(dh * W + dw)) % L              # static python int
                    col_ref[rows, :] = (pltpu.roll(x, shift, 1)
                                        * mask_ref[rows, :])
                t += 1

    x = x_ref[...].astype(jnp.float32)

    # --- Conv2dBlock 1: conv -> bias -> ReLU (intermediate never leaves VMEM) ---
    im2col(x)
    mid = jnp.dot(w1_ref[...], col_ref[...],
                  preferred_element_type=jnp.float32)          # (C, L)
    mid = jnp.maximum(mid + b1_ref[...], 0.0)

    # --- Conv2dBlock 2: conv -> bias -> ReLU ---
    im2col(mid)
    out = jnp.dot(w2_ref[...], col_ref[...],
                  preferred_element_type=jnp.float32)          # (Cout, L)
    out = jnp.maximum(out + b2_ref[...], 0.0)

    o_ref[...] = out.astype(o_ref.dtype)


def _grid_steps(N):
    """One grid step per TensorCore-worth of images.

    v7x exposes 2 TensorCores per chip (sharded via 'parallel' semantics);
    v5e/v6e have a single TC where extra grid steps are pure per-step overhead,
    so the whole batch is folded into one lane-dense step there.
    """
    try:
        kind = jax.devices()[0].device_kind.lower()
    except Exception:
        kind = ""
    n_tc = 2 if "v7" in kind else 1
    steps = min(N, n_tc)
    while steps > 1 and N % steps:
        steps -= 1
    return max(steps, 1)


def double_conv2d_block(x_nchw, params, padding):
    """Fused DoubleConv2dBlock forward. params: [(v, g, b), (v, g, b)] (OIHW)."""
    N, Cin, H, W = x_nchw.shape
    (v1, g1, b1), (v2, g2, b2) = params
    Cmid, _, KH, KW = v1.shape
    Cout = v2.shape[0]
    # TODO(synk): general stride/dilation and non-'same'/'reflect' padding are not
    # covered by this fused roll-based formulation (module defaults used here).
    assert KH == KW and padding == (KH - 1) // 2, "fused kernel assumes 'same' conv"

    # Shared channel padding so every im2col tap is a full 8-sublane f32 tile
    # and both convs use the same K / scratch / mask layout.
    Cp = max(_round_up(Cin, 8), _round_up(Cmid, 8))
    K = KH * KW * Cp

    # Plain-JAX parameter glue: weight norm + zero-pad channels + flatten to
    # lane-friendly 2D in (kh, kw, cin) column order (matches tap order).
    w1 = weight_norm(v1, g1)                                   # (Cmid, Cin, KH, KW)
    w2 = weight_norm(v2, g2)                                   # (Cout, Cmid, KH, KW)
    w1 = jnp.pad(w1, ((0, Cp - Cmid), (0, Cp - Cin), (0, 0), (0, 0)))
    w2 = jnp.pad(w2, ((0, 0), (0, Cp - Cmid), (0, 0), (0, 0)))
    w1_2d = jnp.transpose(w1, (0, 2, 3, 1)).reshape(Cp, K)
    w2_2d = jnp.transpose(w2, (0, 2, 3, 1)).reshape(Cout, K)
    b1_2d = jnp.pad(b1, (0, Cp - Cmid)).reshape(Cp, 1)
    b2_2d = b2.reshape(Cout, 1)

    # Fold batch into the lane axis: (Cp, N*H*W), channel-major, lane-dense.
    x_cm = jnp.pad(x_nchw, ((0, 0), (0, Cp - Cin), (0, 0), (0, 0)))
    x_cm = jnp.transpose(x_cm, (1, 0, 2, 3)).reshape(Cp, N * H * W)

    steps = _grid_steps(N)
    imgs_per_step = N // steps
    L = imgs_per_step * H * W                                  # lanes per grid step
    mask = _build_tap_mask(H, W, KH, KW, Cp, imgs_per_step)    # (K, L)

    kernel = functools.partial(_double_conv_kernel, W=W, KH=KH, KW=KW, C=Cp)
    out_cm = pl.pallas_call(
        kernel,
        out_shape=jax.ShapeDtypeStruct((Cout, N * H * W), x_nchw.dtype),
        grid=(steps,),
        in_specs=[
            pl.BlockSpec((Cp, L), lambda i: (0, i)),
            pl.BlockSpec((Cp, K), lambda i: (0, 0)),
            pl.BlockSpec((Cp, 1), lambda i: (0, 0)),
            pl.BlockSpec((Cout, K), lambda i: (0, 0)),
            pl.BlockSpec((Cout, 1), lambda i: (0, 0)),
            pl.BlockSpec((K, L), lambda i: (0, 0)),
        ],
        out_specs=pl.BlockSpec((Cout, L), lambda i: (0, i)),
        scratch_shapes=[pltpu.VMEM((K, L), jnp.float32)],
        compiler_params=pltpu.CompilerParams(dimension_semantics=("parallel",)),
    )(x_cm, w1_2d, b1_2d, w2_2d, b2_2d, mask)

    # Layout plumbing back to NCHW (tiny XLA transpose outside the kernel).
    return jnp.transpose(out_cm.reshape(Cout, N, H, W), (1, 0, 2, 3))


def _reference(x_nchw, params, padding):
    """Pure-JAX reference (lax.conv) for correctness checking."""
    x = x_nchw
    for (v, g, b) in params:
        w = weight_norm(v, g)                                  # OIHW
        y = lax.conv_general_dilated(
            x, w, window_strides=(1, 1),
            padding=[(padding, padding), (padding, padding)],
            dimension_numbers=('NCHW', 'OIHW', 'NCHW'))
        y = y + b[None, :, None, None]
        x = jnp.maximum(y, 0.0)
    return x


if __name__ == "__main__":
    # Module hyperparameters (defaults: norm='weight', activation='relu',
    # pad_type='zero', use_bias=True, stride=1, dilation=1).
    input_dim, output_dim, kernel_size, padding = 4, 8, 3, 1
    N, H, W = 2, 16, 16

    key = jax.random.PRNGKey(0)
    kx, kv1, kg1, kb1, kv2, kg2, kb2 = jax.random.split(key, 7)

    x = jax.random.normal(kx, (N, input_dim, H, W), jnp.float32)

    # Conv2dBlock 1: (output_dim, input_dim, k, k)
    v1 = jax.random.normal(kv1, (output_dim, input_dim, kernel_size, kernel_size),
                           jnp.float32) * 0.1
    g1 = jax.random.uniform(kg1, (output_dim,), jnp.float32, 0.5, 1.5)
    b1 = jax.random.normal(kb1, (output_dim,), jnp.float32) * 0.1
    # Conv2dBlock 2: (output_dim, output_dim, k, k)
    v2 = jax.random.normal(kv2, (output_dim, output_dim, kernel_size, kernel_size),
                           jnp.float32) * 0.1
    g2 = jax.random.uniform(kg2, (output_dim,), jnp.float32, 0.5, 1.5)
    b2 = jax.random.normal(kb2, (output_dim,), jnp.float32) * 0.1

    params = [(v1, g1, b1), (v2, g2, b2)]

    out = double_conv2d_block(x, params, padding)
    out = jax.block_until_ready(out)

    ref = jax.block_until_ready(_reference(x, params, padding))
    np.testing.assert_allclose(np.asarray(out), np.asarray(ref),
                               rtol=1e-5, atol=1e-5)

    print("KERNEL_OK")
</pallas_src>

<mosaic_0001>
module attributes {stable_mosaic.version = 11 : i64} {
  func.func @_double_conv_kernel(%arg0: i32, %arg1: memref<8x512xf32, #tpu.memory_space<vmem>>, %arg2: memref<8x72xf32, #tpu.memory_space<vmem>>, %arg3: memref<8x1xf32, #tpu.memory_space<vmem>>, %arg4: memref<8x72xf32, #tpu.memory_space<vmem>>, %arg5: memref<8x1xf32, #tpu.memory_space<vmem>>, %arg6: memref<72x512xf32, #tpu.memory_space<vmem>>, %arg7: memref<8x512xf32, #tpu.memory_space<vmem>>, %arg8: memref<72x512xf32, #tpu.memory_space<vmem>>) attributes {dimension_semantics = [#tpu.dimension_semantics<parallel>], iteration_bounds = array<i64: 1>, scalar_prefetch = 0 : i64, scratch_operands = 1 : i64, tpu.core_type = #tpu.core_type<tc>, window_params = [{transform_indices = @transform_0, window_bounds = array<i64: 8, 512>}, {pipeline_mode = #tpu.pipeline_mode<synchronous>, transform_indices = @transform_1, window_bounds = array<i64: 8, 72>}, {pipeline_mode = #tpu.pipeline_mode<synchronous>, transform_indices = @transform_2, window_bounds = array<i64: 8, 1>}, {pipeline_mode = #tpu.pipeline_mode<synchronous>, transform_indices = @transform_3, window_bounds = array<i64: 8, 72>}, {pipeline_mode = #tpu.pipeline_mode<synchronous>, transform_indices = @transform_4, window_bounds = array<i64: 8, 1>}, {pipeline_mode = #tpu.pipeline_mode<synchronous>, transform_indices = @transform_5, window_bounds = array<i64: 72, 512>}, {transform_indices = @transform_6, window_bounds = array<i64: 8, 512>}]} {
    %c0 = arith.constant 0 : index
    %c0_0 = arith.constant 0 : index
    %0 = vector.load %arg1[%c0, %c0_0] : memref<8x512xf32, #tpu.memory_space<vmem>>, vector<8x512xf32>
    %c17_i32 = arith.constant 17 : i32
    %1 = tpu.dynamic_rotate %0 by %c17_i32 dim 1 : vector<8x512xf32>, i32 -> vector<8x512xf32>
    %c0_1 = arith.constant 0 : index
    %c0_2 = arith.constant 0 : index
    %2 = vector.load %arg6[%c0_1, %c0_2] : memref<72x512xf32, #tpu.memory_space<vmem>>, vector<8x512xf32>
    %3 = arith.mulf %1, %2 : vector<8x512xf32>
    %c0_3 = arith.constant 0 : index
    %c0_4 = arith.constant 0 : index
    %4 = vector.load %arg8[%c0_3, %c0_4] : memref<72x512xf32, #tpu.memory_space<vmem>>, vector<8x512xf32>
    tpu.vector_store %arg8[%c0_3, %c0_4], %3 {strides = array<i32>} : memref<72x512xf32, #tpu.memory_space<vmem>>, vector<8x512xf32>,
    %c16_i32 = arith.constant 16 : i32
    %5 = tpu.dynamic_rotate %0 by %c16_i32 dim 1 : vector<8x512xf32>, i32 -> vector<8x512xf32>
    %c8 = arith.constant 8 : index
    %c0_5 = arith.constant 0 : index
    %6 = vector.load %arg6[%c8, %c0_5] : memref<72x512xf32, #tpu.memory_space<vmem>>, vector<8x512xf32>
    %7 = arith.mulf %5, %6 : vector<8x512xf32>
    %c8_6 = arith.constant 8 : index
    %c0_7 = arith.constant 0 : index
    %8 = vector.load %arg8[%c8_6, %c0_7] : memref<72x512xf32, #tpu.memory_space<vmem>>, vector<8x512xf32>
    tpu.vector_store %arg8[%c8_6, %c0_7], %7 {strides = array<i32>} : memref<72x512xf32, #tpu.memory_space<vmem>>, vector<8x512xf32>,
    %c15_i32 = arith.constant 15 : i32
    %9 = tpu.dynamic_rotate %0 by %c15_i32 dim 1 : vector<8x512xf32>, i32 -> vector<8x512xf32>
    %c16 = arith.constant 16 : index
    %c0_8 = arith.constant 0 : index
    %10 = vector.load %arg6[%c16, %c0_8] : memref<72x512xf32, #tpu.memory_space<vmem>>, vector<8x512xf32>
    %11 = arith.mulf %9, %10 : vector<8x512xf32>
    %c16_9 = arith.constant 16 : index
    %c0_10 = arith.constant 0 : index
    %12 = vector.load %arg8[%c16_9, %c0_10] : memref<72x512xf32, #tpu.memory_space<vmem>>, vector<8x512xf32>
    tpu.vector_store %arg8[%c16_9, %c0_10], %11 {strides = array<i32>} : memref<72x512xf32, #tpu.memory_space<vmem>>, vector<8x512xf32>,
    %c1_i32 = arith.constant 1 : i32
    %13 = tpu.dynamic_rotate %0 by %c1_i32 dim 1 : vector<8x512xf32>, i32 -> vector<8x512xf32>
    %c24 = arith.constant 24 : index
    %c0_11 = arith.constant 0 : index
    %14 = vector.load %arg6[%c24, %c0_11] : memref<72x512xf32, #tpu.memory_space<vmem>>, vector<8x512xf32>
    %15 = arith.mulf %13, %14 : vector<8x512xf32>
    %c24_12 = arith.constant 24 : index
    %c0_13 = arith.constant 0 : index
    %16 = vector.load %arg8[%c24_12, %c0_13] : memref<72x512xf32, #tpu.memory_space<vmem>>, vector<8x512xf32>
    tpu.vector_store %arg8[%c24_12, %c0_13], %15 {strides = array<i32>} : memref<72x512xf32, #tpu.memory_space<vmem>>, vector<8x512xf32>,
    %c32 = arith.constant 32 : index
    %c0_14 = arith.constant 0 : index
    %17 = vector.load %arg8[%c32, %c0_14] : memref<72x512xf32, #tpu.memory_space<vmem>>, vector<8x512xf32>
    tpu.vector_store %arg8[%c32, %c0_14], %0 {strides = array<i32>} : memref<72x512xf32, #tpu.memory_space<vmem>>, vector<8x512xf32>,
    %c511_i32 = arith.constant 511 : i32
    %18 = tpu.dynamic_rotate %0 by %c511_i32 dim 1 : vector<8x512xf32>, i32 -> vector<8x512xf32>
    %c40 = arith.constant 40 : index
    %c0_15 = arith.constant 0 : index
    %19 = vector.load %arg6[%c40, %c0_15] : memref<72x512xf32, #tpu.memory_space<vmem>>, vector<8x512xf32>
    %20 = arith.mulf %18, %19 : vector<8x512xf32>
    %c40_16 = arith.constant 40 : index
    %c0_17 = arith.constant 0 : index
    %21 = vector.load %arg8[%c40_16, %c0_17] : memref<72x512xf32, #tpu.memory_space<vmem>>, vector<8x512xf32>
    tpu.vector_store %arg8[%c40_16, %c0_17], %20 {strides = array<i32>} : memref<72x512xf32, #tpu.memory_space<vmem>>, vector<8x512xf32>,
    %c497_i32 = arith.constant 497 : i32
    %22 = tpu.dynamic_rotate %0 by %c497_i32 dim 1 : vector<8x512xf32>, i32 -> vector<8x512xf32>
    %c48 = arith.constant 48 : index
    %c0_18 = arith.constant 0 : index
    %23 = vector.load %arg6[%c48, %c0_18] : memref<72x512xf32, #tpu.memory_space<vmem>>, vector<8x512xf32>
    %24 = arith.mulf %22, %23 : vector<8x512xf32>
    %c48_19 = arith.constant 48 : index
    %c0_20 = arith.constant 0 : index
    %25 = vector.load %arg8[%c48_19, %c0_20] : memref<72x512xf32, #tpu.memory_space<vmem>>, vector<8x512xf32>
    tpu.vector_store %arg8[%c48_19, %c0_20], %24 {strides = array<i32>} : memref<72x512xf32, #tpu.memory_space<vmem>>, vector<8x512xf32>,
    %c496_i32 = arith.constant 496 : i32
    %26 = tpu.dynamic_rotate %0 by %c496_i32 dim 1 : vector<8x512xf32>, i32 -> vector<8x512xf32>
    %c56 = arith.constant 56 : index
    %c0_21 = arith.constant 0 : index
    %27 = vector.load %arg6[%c56, %c0_21] : memref<72x512xf32, #tpu.memory_space<vmem>>, vector<8x512xf32>
    %28 = arith.mulf %26, %27 : vector<8x512xf32>
    %c56_22 = arith.constant 56 : index
    %c0_23 = arith.constant 0 : index
    %29 = vector.load %arg8[%c56_22, %c0_23] : memref<72x512xf32, #tpu.memory_space<vmem>>, vector<8x512xf32>
    tpu.vector_store %arg8[%c56_22, %c0_23], %28 {strides = array<i32>} : memref<72x512xf32, #tpu.memory_space<vmem>>, vector<8x512xf32>,
    %c495_i32 = arith.constant 495 : i32
    %30 = tpu.dynamic_rotate %0 by %c495_i32 dim 1 : vector<8x512xf32>, i32 -> vector<8x512xf32>
    %c64 = arith.constant 64 : index
    %c0_24 = arith.constant 0 : index
    %31 = vector.load %arg6[%c64, %c0_24] : memref<72x512xf32, #tpu.memory_space<vmem>>, vector<8x512xf32>
    %32 = arith.mulf %30, %31 : vector<8x512xf32>
    %c64_25 = arith.constant 64 : index
    %c0_26 = arith.constant 0 : index
    %33 = vector.load %arg8[%c64_25, %c0_26] : memref<72x512xf32, #tpu.memory_space<vmem>>, vector<8x512xf32>
    tpu.vector_store %arg8[%c64_25, %c0_26], %32 {strides = array<i32>} : memref<72x512xf32, #tpu.memory_space<vmem>>, vector<8x512xf32>,
    %c0_27 = arith.constant 0 : index
    %c0_28 = arith.constant 0 : index
    %34 = vector.load %arg2[%c0_27, %c0_28] : memref<8x72xf32, #tpu.memory_space<vmem>>, vector<8x72xf32>
    %c0_29 = arith.constant 0 : index
    %c0_30 = arith.constant 0 : index
    %35 = vector.load %arg8[%c0_29, %c0_30] : memref<72x512xf32, #tpu.memory_space<vmem>>, vector<72x512xf32>
    %cst = arith.constant dense<0.000000e+00> : vector<8x512xf32>
    %36 = tpu.matmul %34, %35, %cst {dimension_numbers = #tpu.dot_dimension_numbers<[1], [0], [0], [1], [0, 0, 1, 1], [], []>} : vector<8x72xf32>, vector<72x512xf32>, vector<8x512xf32> -> vector<8x512xf32>
    %c0_31 = arith.constant 0 : index
    %c0_32 = arith.constant 0 : index
    %37 = vector.load %arg3[%c0_31, %c0_32] : memref<8x1xf32, #tpu.memory_space<vmem>>, vector<8x1xf32>
    %38 = vector.broadcast %37 : vector<8x1xf32> to vector<8x512xf32>
    %39 = arith.addf %36, %38 : vector<8x512xf32>
    %cst_33 = arith.constant 0.000000e+00 : f32
    %40 = vector.broadcast %cst_33 : f32 to vector<8x512xf32>
    %41 = arith.maximumf %39, %40 : vector<8x512xf32>
    %c17_i32_34 = arith.constant 17 : i32
    %42 = tpu.dynamic_rotate %41 by %c17_i32_34 dim 1 : vector<8x512xf32>, i32 -> vector<8x512xf32>
    %c0_35 = arith.constant 0 : index
    %c0_36 = arith.constant 0 : index
    %43 = vector.load %arg6[%c0_35, %c0_36] : memref<72x512xf32, #tpu.memory_space<vmem>>, vector<8x512xf32>
    %44 = arith.mulf %42, %43 : vector<8x512xf32>
    %c0_37 = arith.constant 0 : index
    %c0_38 = arith.constant 0 : index
    %45 = vector.load %arg8[%c0_37, %c0_38] : memref<72x512xf32, #tpu.memory_space<vmem>>, vector<8x512xf32>
    tpu.vector_store %arg8[%c0_37, %c0_38], %44 {strides = array<i32>} : memref<72x512xf32, #tpu.memory_space<vmem>>, vector<8x512xf32>,
    %c16_i32_39 = arith.constant 16 : i32
    %46 = tpu.dynamic_rotate %41 by %c16_i32_39 dim 1 : vector<8x512xf32>, i32 -> vector<8x512xf32>
    %c8_40 = arith.constant 8 : index
    %c0_41 = arith.constant 0 : index
    %47 = vector.load %arg6[%c8_40, %c0_41] : memref<72x512xf32, #tpu.memory_space<vmem>>, vector<8x512xf32>
    %48 = arith.mulf %46, %47 : vector<8x512xf32>
    %c8_42 = arith.constant 8 : index
    %c0_43 = arith.constant 0 : index
    %49 = vector.load %arg8[%c8_42, %c0_43] : memref<72x512xf32, #tpu.memory_space<vmem>>, vector<8x512xf32>
    tpu.vector_store %arg8[%c8_42, %c0_43], %48 {strides = array<i32>} : memref<72x512xf32, #tpu.memory_space<vmem>>, vector<8x512xf32>,
    %c15_i32_44 = arith.constant 15 : i32
    %50 = tpu.dynamic_rotate %41 by %c15_i32_44 dim 1 : vector<8x512xf32>, i32 -> vector<8x512xf32>
    %c16_45 = arith.constant 16 : index
    %c0_46 = arith.constant 0 : index
    %51 = vector.load %arg6[%c16_45, %c0_46] : memref<72x512xf32, #tpu.memory_space<vmem>>, vector<8x512xf32>
    %52 = arith.mulf %50, %51 : vector<8x512xf32>
    %c16_47 = arith.constant 16 : index
    %c0_48 = arith.constant 0 : index
    %53 = vector.load %arg8[%c16_47, %c0_48] : memref<72x512xf32, #tpu.memory_space<vmem>>, vector<8x512xf32>
    tpu.vector_store %arg8[%c16_47, %c0_48], %52 {strides = array<i32>} : memref<72x512xf32, #tpu.memory_space<vmem>>, vector<8x512xf32>,
    %c1_i32_49 = arith.constant 1 : i32
    %54 = tpu.dynamic_rotate %41 by %c1_i32_49 dim 1 : vector<8x512xf32>, i32 -> vector<8x512xf32>
    %c24_50 = arith.constant 24 : index
    %c0_51 = arith.constant 0 : index
    %55 = vector.load %arg6[%c24_50, %c0_51] : memref<72x512xf32, #tpu.memory_space<vmem>>, vector<8x512xf32>
    %56 = arith.mulf %54, %55 : vector<8x512xf32>
    %c24_52 = arith.constant 24 : index
    %c0_53 = arith.constant 0 : index
    %57 = vector.load %arg8[%c24_52, %c0_53] : memref<72x512xf32, #tpu.memory_space<vmem>>, vector<8x512xf32>
    tpu.vector_store %arg8[%c24_52, %c0_53], %56 {strides = array<i32>} : memref<72x512xf32, #tpu.memory_space<vmem>>, vector<8x512xf32>,
    %c32_54 = arith.constant 32 : index
    %c0_55 = arith.constant 0 : index
    %58 = vector.load %arg8[%c32_54, %c0_55] : memref<72x512xf32, #tpu.memory_space<vmem>>, vector<8x512xf32>
    tpu.vector_store %arg8[%c32_54, %c0_55], %41 {strides = array<i32>} : memref<72x512xf32, #tpu.memory_space<vmem>>, vector<8x512xf32>,
    %c511_i32_56 = arith.constant 511 : i32
    %59 = tpu.dynamic_rotate %41 by %c511_i32_56 dim 1 : vector<8x512xf32>, i32 -> vector<8x512xf32>
    %c40_57 = arith.constant 40 : index
    %c0_58 = arith.constant 0 : index
    %60 = vector.load %arg6[%c40_57, %c0_58] : memref<72x512xf32, #tpu.memory_space<vmem>>, vector<8x512xf32>
    %61 = arith.mulf %59, %60 : vector<8x512xf32>
    %c40_59 = arith.constant 40 : index
    %c0_60 = arith.constant 0 : index
    %62 = vector.load %arg8[%c40_59, %c0_60] : memref<72x512xf32, #tpu.memory_space<vmem>>, vector<8x512xf32>
    tpu.vector_store %arg8[%c40_59, %c0_60], %61 {strides = array<i32>} : memref<72x512xf32, #tpu.memory_space<vmem>>, vector<8x512xf32>,
    %c497_i32_61 = arith.constant 497 : i32
    %63 = tpu.dynamic_rotate %41 by %c497_i32_61 dim 1 : vector<8x512xf32>, i32 -> vector<8x512xf32>
    %c48_62 = arith.constant 48 : index
    %c0_63 = arith.constant 0 : index
    %64 = vector.load %arg6[%c48_62, %c0_63] : memref<72x512xf32, #tpu.memory_space<vmem>>, vector<8x512xf32>
    %65 = arith.mulf %63, %64 : vector<8x512xf32>
    %c48_64 = arith.constant 48 : index
    %c0_65 = arith.constant 0 : index
    %66 = vector.load %arg8[%c48_64, %c0_65] : memref<72x512xf32, #tpu.memory_space<vmem>>, vector<8x512xf32>
    tpu.vector_store %arg8[%c48_64, %c0_65], %65 {strides = array<i32>} : memref<72x512xf32, #tpu.memory_space<vmem>>, vector<8x512xf32>,
    %c496_i32_66 = arith.constant 496 : i32
    %67 = tpu.dynamic_rotate %41 by %c496_i32_66 dim 1 : vector<8x512xf32>, i32 -> vector<8x512xf32>
    %c56_67 = arith.constant 56 : index
    %c0_68 = arith.constant 0 : index
    %68 = vector.load %arg6[%c56_67, %c0_68] : memref<72x512xf32, #tpu.memory_space<vmem>>, vector<8x512xf32>
    %69 = arith.mulf %67, %68 : vector<8x512xf32>
    %c56_69 = arith.constant 56 : index
    %c0_70 = arith.constant 0 : index
    %70 = vector.load %arg8[%c56_69, %c0_70] : memref<72x512xf32, #tpu.memory_space<vmem>>, vector<8x512xf32>
    tpu.vector_store %arg8[%c56_69, %c0_70], %69 {strides = array<i32>} : memref<72x512xf32, #tpu.memory_space<vmem>>, vector<8x512xf32>,
    %c495_i32_71 = arith.constant 495 : i32
    %71 = tpu.dynamic_rotate %41 by %c495_i32_71 dim 1 : vector<8x512xf32>, i32 -> vector<8x512xf32>
    %c64_72 = arith.constant 64 : index
    %c0_73 = arith.constant 0 : index
    %72 = vector.load %arg6[%c64_72, %c0_73] : memref<72x512xf32, #tpu.memory_space<vmem>>, vector<8x512xf32>
    %73 = arith.mulf %71, %72 : vector<8x512xf32>
    %c64_74 = arith.constant 64 : index
    %c0_75 = arith.constant 0 : index
    %74 = vector.load %arg8[%c64_74, %c0_75] : memref<72x512xf32, #tpu.memory_space<vmem>>, vector<8x512xf32>
    tpu.vector_store %arg8[%c64_74, %c0_75], %73 {strides = array<i32>} : memref<72x512xf32, #tpu.memory_space<vmem>>, vector<8x512xf32>,
    %c0_76 = arith.constant 0 : index
    %c0_77 = arith.constant 0 : index
    %75 = vector.load %arg4[%c0_76, %c0_77] : memref<8x72xf32, #tpu.memory_space<vmem>>, vector<8x72xf32>
    %c0_78 = arith.constant 0 : index
    %c0_79 = arith.constant 0 : index
    %76 = vector.load %arg8[%c0_78, %c0_79] : memref<72x512xf32, #tpu.memory_space<vmem>>, vector<72x512xf32>
    %cst_80 = arith.constant dense<0.000000e+00> : vector<8x512xf32>
    %77 = tpu.matmul %75, %76, %cst_80 {dimension_numbers = #tpu.dot_dimension_numbers<[1], [0], [0], [1], [0, 0, 1, 1], [], []>} : vector<8x72xf32>, vector<72x512xf32>, vector<8x512xf32> -> vector<8x512xf32>
    %c0_81 = arith.constant 0 : index
    %c0_82 = arith.constant 0 : index
    %78 = vector.load %arg5[%c0_81, %c0_82] : memref<8x1xf32, #tpu.memory_space<vmem>>, vector<8x1xf32>
    %79 = vector.broadcast %78 : vector<8x1xf32> to vector<8x512xf32>
    %80 = arith.addf %77, %79 : vector<8x512xf32>
    %cst_83 = arith.constant 0.000000e+00 : f32
    %81 = vector.broadcast %cst_83 : f32 to vector<8x512xf32>
    %82 = arith.maximumf %80, %81 : vector<8x512xf32>
    %c0_84 = arith.constant 0 : index
    %c0_85 = arith.constant 0 : index
    %83 = vector.load %arg7[%c0_84, %c0_85] : memref<8x512xf32, #tpu.memory_space<vmem>>, vector<8x512xf32>
    tpu.vector_store %arg7[%c0_84, %c0_85], %82 {strides = array<i32>} : memref<8x512xf32, #tpu.memory_space<vmem>>, vector<8x512xf32>,
    return
  }
  func.func @transform_0(%arg0: i32) -> (i32, i32) {
    %c0_i32 = arith.constant 0 : i32
    %c0_i32_0 = arith.constant 0 : i32
    return %c0_i32, %arg0 : i32, i32
  }
  func.func @transform_1(%arg0: i32) -> (i32, i32) {
    %c0_i32 = arith.constant 0 : i32
    %c0_i32_0 = arith.constant 0 : i32
    %c0_i32_1 = arith.constant 0 : i32
    return %c0_i32, %c0_i32_0 : i32, i32
  }
  func.func @transform_2(%arg0: i32) -> (i32, i32) {
    %c0_i32 = arith.constant 0 : i32
    %c0_i32_0 = arith.constant 0 : i32
    %c0_i32_1 = arith.constant 0 : i32
    return %c0_i32, %c0_i32_0 : i32, i32
  }
  func.func @transform_3(%arg0: i32) -> (i32, i32) {
    %c0_i32 = arith.constant 0 : i32
    %c0_i32_0 = arith.constant 0 : i32
    %c0_i32_1 = arith.constant 0 : i32
    return %c0_i32, %c0_i32_0 : i32, i32
  }
  func.func @transform_4(%arg0: i32) -> (i32, i32) {
    %c0_i32 = arith.constant 0 : i32
    %c0_i32_0 = arith.constant 0 : i32
    %c0_i32_1 = arith.constant 0 : i32
    return %c0_i32, %c0_i32_0 : i32, i32
  }
  func.func @transform_5(%arg0: i32) -> (i32, i32) {
    %c0_i32 = arith.constant 0 : i32
    %c0_i32_0 = arith.constant 0 : i32
    %c0_i32_1 = arith.constant 0 : i32
    return %c0_i32, %c0_i32_0 : i32, i32
  }
  func.func @transform_6(%arg0: i32) -> (i32, i32) {
    %c0_i32 = arith.constant 0 : i32
    %c0_i32_0 = arith.constant 0 : i32
    return %c0_i32, %arg0 : i32, i32
  }
}

</mosaic_0001>

<llo_original>
// kernel: tpu_custom_call.1
$region0: #{tpu_custom_call.1}
  #allocation0 [shape = 'u32[]', space=smem, size = 0x4, offset = 0x4, fixed_abs, tag = 'smem constant byte address 0x4 - core index']
  #allocation1 [shape = 'u32[144,128]{1,0:T(1,128)}', space=vmem, size = 0x12000, scoped, tag = 'internal scratch']
  #allocation2 [shape = 'f32[72,512]{1,0:T(8,128)}', space=vmem, size = 0x24000, scoped, tag = 'scratch operand']
  %s0 = inlined_call_operand.hbm [shape: f32[8,512], index: 0, kind: input, shape index: {}]
  %s1 = inlined_call_operand.vmem [shape: f32[8,72], index: 1, kind: input, shape index: {}]
  %s2 = inlined_call_operand.vmem [shape: f32[8,1], index: 2, kind: input, shape index: {}]
  %s3 = inlined_call_operand.vmem [shape: f32[8,72], index: 3, kind: input, shape index: {}]
  %s4 = inlined_call_operand.vmem [shape: f32[8,1], index: 4, kind: input, shape index: {}]
  %s5 = inlined_call_operand.hbm [shape: f32[72,512], index: 5, kind: input, shape index: {}]
  %s6 = inlined_call_operand.hbm [shape: f32[8,512], index: 6, kind: output, shape index: {}]
  %s7 = sld [smem:[#allocation0]]
  $region42: #{tpu_custom_call.1} parent=0
    _
  %s9 = ssub.s32 1, %s7
  %s10 = scalar_select 0, %s9, %s7
  $region1: #{tpu_custom_call.1} parent=0
    #allocation3 [shape = 'u8[16384]{0}', space=vmem, size = 0x4000, scoped, tag = 'input window, operand 0, single buffered']
    #allocation4 [shape = 's32[1]{0}', space=sflag, size = 0x4, scoped, tag = 'scoped memory for tpu_custom_call.1']
    #allocation5 [shape = 's32[1]{0}', space=sflag, size = 0x4, scoped, tag = 'scoped memory for tpu_custom_call.1']
    #allocation6 [shape = 'u8[147456]{0}', space=vmem, size = 0x24000, scoped, tag = 'input window, operand 5, single buffered']
    #allocation7 [shape = 's32[1]{0}', space=sflag, size = 0x4, scoped, tag = 'scoped memory for tpu_custom_call.1']
    #allocation8 [shape = 'u8[16384]{0}', space=vmem, size = 0x4000, scoped, tag = 'output window, operand 0, single buffered']
    %11 = vsyncpa [#allocation4], 0
    %12 = vsyncpa [#allocation7], 0
    %13 = vsyncpa [#allocation5], 0
    // Predicated region
    $region2: #{tpu_custom_call.1} parent=1 // pred_check
      _
    $region3: #{tpu_custom_call.1} parent=1 // pred_check_branch
      %15 = sbr.rel (0) target = $region5
    $region4: #{tpu_custom_call.1} parent=1 // pred_region
      %s17 = ssub.s32 512, 512
      %18 = vsyncadd [#allocation4], %s17
      %s20 = sshll.u32 [#allocation3], 4
      %s21 = int_to_ptr.vmem [resolvable:$true] %s20
      %23 = dma.hbm_to_vmem [thread:$0]  %s0, 512, %s21, [#allocation4]
    $region5: #{tpu_custom_call.1} parent=1 // pred_fallthru
      _
    // Predicated region
    $region6: #{tpu_custom_call.1} parent=1 // pred_check
      _
    $region7: #{tpu_custom_call.1} parent=1 // pred_check_branch
      %25 = sbr.rel (0) target = $region9
    $region8: #{tpu_custom_call.1} parent=1 // pred_region
      _
    $region9: #{tpu_custom_call.1} parent=1 // pred_fallthru
      _
    // Predicated region
    $region10: #{tpu_custom_call.1} parent=1 // pred_check
      _
    $region11: #{tpu_custom_call.1} parent=1 // pred_check_branch
      %27 = sbr.rel (0) target = $region13
    $region12: #{tpu_custom_call.1} parent=1 // pred_region
      _
    $region13: #{tpu_custom_call.1} parent=1 // pred_fallthru
      _
    // Predicated region
    $region14: #{tpu_custom_call.1} parent=1 // pred_check
      _
    $region15: #{tpu_custom_call.1} parent=1 // pred_check_branch
      %29 = sbr.rel (0) target = $region17
    $region16: #{tpu_custom_call.1} parent=1 // pred_region
      _
    $region17: #{tpu_custom_call.1} parent=1 // pred_fallthru
      _
    // Predicated region
    $region18: #{tpu_custom_call.1} parent=1 // pred_check
      _
    $region19: #{tpu_custom_call.1} parent=1 // pred_check_branch
      %31 = sbr.rel (0) target = $region21
    $region20: #{tpu_custom_call.1} parent=1 // pred_region
      _
    $region21: #{tpu_custom_call.1} parent=1 // pred_fallthru
      _
    // Predicated region
    $region22: #{tpu_custom_call.1} parent=1 // pred_check
      _
    $region23: #{tpu_custom_call.1} parent=1 // pred_check_branch
      %33 = sbr.rel (0) target = $region25
    $region24: #{tpu_custom_call.1} parent=1 // pred_region
      %s35 = ssub.s32 4608, 4608
      %36 = vsyncadd [#allocation7], %s35
      %s37 = sshll.u32 [#allocation6], 4
      %s38 = int_to_ptr.vmem [resolvable:$true] %s37
      %43 = dma.hbm_to_vmem [thread:$0]  %s5, 4608, %s38, [#allocation7], 512, 512, 32
    $region25: #{tpu_custom_call.1} parent=1 // pred_fallthru
      _
    // Predicated region
    $region26: #{tpu_custom_call.1} parent=1 // pred_check
      _
    $region27: #{tpu_custom_call.1} parent=1 // pred_check_branch
      %45 = sbr.rel (0) target = $region29
    $region28: #{tpu_custom_call.1} parent=1 // pred_region
      %46 = dma.done [#allocation4], 512
    $region29: #{tpu_custom_call.1} parent=1 // pred_fallthru
      _
    // Predicated region
    $region30: #{tpu_custom_call.1} parent=1 // pred_check
      _
    $region31: #{tpu_custom_call.1} parent=1 // pred_check_branch
      %48 = sbr.rel (0) target = $region33
    $region32: #{tpu_custom_call.1} parent=1 // pred_region
      %49 = dma.done [#allocation7], 4608
    $region33: #{tpu_custom_call.1} parent=1 // pred_fallthru
      _
    %v50 = vld [vmem:[#allocation3] sm:$0xff]
    %v51 = vld [vmem:[#allocation3 + $0x8] sm:$0xff]
    %v52 = vld [vmem:[#allocation3 + $0x10] sm:$0xff]
    %v53 = vld [vmem:[#allocation3 + $0x18] sm:$0xff]
    %54 = vrot.lane.b32.xlu0 %v50, 17
    %v55 = vpop.permute.xlu0 %54
    %56 = vrot.lane.b32.xlu0 %v51, 17
    %v57 = vpop.permute.xlu0 %56
    %58 = vrot.lane.b32.xlu0 %v52, 17
    %v59 = vpop.permute.xlu0 %58
    %60 = vrot.lane.b32.xlu0 %v53, 17
    %v61 = vpop.permute.xlu0 %60
    %v62 = vlaneseq
    %v63 = vand.u32 %v62, 127
    %vm64 = vcmp.lt.s32.totalorder %v63, 17
    %v65 = vsel %vm64, %v59, %v61
    %v66 = vsel %vm64, %v57, %v59
    %v67 = vsel %vm64, %v55, %v57
    %v68 = vsel %vm64, %v61, %v55
    %v69 = vld [vmem:[#allocation6] sm:$0xff]
    %v70 = vld [vmem:[#allocation6 + $0x8] sm:$0xff]
    %v71 = vld [vmem:[#allocation6 + $0x10] sm:$0xff]
    %v72 = vld [vmem:[#allocation6 + $0x18] sm:$0xff]
    %v73 = vmul.f32 %v68, %v69
    %v74 = vmul.f32 %v67, %v70
    %v75 = vmul.f32 %v66, %v71
    %v76 = vmul.f32 %v65, %v72
    %77 = vst [vmem:[#allocation2] sm:$0xff] %v73
    %78 = vst [vmem:[#allocation2 + $0x8] sm:$0xff] %v74
    %79 = vst [vmem:[#allocation2 + $0x10] sm:$0xff] %v75
    %80 = vst [vmem:[#allocation2 + $0x18] sm:$0xff] %v76
    %81 = vrot.lane.b32.xlu0 %v50, 16
    %v82 = vpop.permute.xlu0 %81
    %83 = vrot.lane.b32.xlu0 %v51, 16
    %v84 = vpop.permute.xlu0 %83
    %85 = vrot.lane.b32.xlu0 %v52, 16
    %v86 = vpop.permute.xlu0 %85
    %87 = vrot.lane.b32.xlu0 %v53, 16
    %v88 = vpop.permute.xlu0 %87
    %vm89 = vcmp.lt.s32.totalorder %v63, 16
    %v90 = vsel %vm89, %v86, %v88
    %v91 = vsel %vm89, %v84, %v86
    %v92 = vsel %vm89, %v82, %v84
    %v93 = vsel %vm89, %v88, %v82
    %v94 = vld [vmem:[#allocation6 + $0x20] sm:$0xff]
    %v95 = vld [vmem:[#allocation6 + $0x28] sm:$0xff]
    %v96 = vld [vmem:[#allocation6 + $0x30] sm:$0xff]
    %v97 = vld [vmem:[#allocation6 + $0x38] sm:$0xff]
    %v98 = vmul.f32 %v93, %v94
    %v99 = vmul.f32 %v92, %v95
    %v100 = vmul.f32 %v91, %v96
    %v101 = vmul.f32 %v90, %v97
    %102 = vst [vmem:[#allocation2 + $0x20] sm:$0xff] %v98
    %103 = vst [vmem:[#allocation2 + $0x28] sm:$0xff] %v99
    %104 = vst [vmem:[#allocation2 + $0x30] sm:$0xff] %v100
    %105 = vst [vmem:[#allocation2 + $0x38] sm:$0xff] %v101
    %106 = vrot.lane.b32.xlu0 %v50, 15
    %v107 = vpop.permute.xlu0 %106
    %108 = vrot.lane.b32.xlu0 %v51, 15
    %v109 = vpop.permute.xlu0 %108
    %110 = vrot.lane.b32.xlu0 %v52, 15
    %v111 = vpop.permute.xlu0 %110
    %112 = vrot.lane.b32.xlu0 %v53, 15
    %v113 = vpop.permute.xlu0 %112
    %vm114 = vcmp.lt.s32.totalorder %v63, 15
    %v115 = vsel %vm114, %v111, %v113
    %v116 = vsel %vm114, %v109, %v111
    %v117 = vsel %vm114, %v107, %v109
    %v118 = vsel %vm114, %v113, %v107
    %v119 = vld [vmem:[#allocation6 + $0x40] sm:$0xff]
    %v120 = vld [vmem:[#allocation6 + $0x48] sm:$0xff]
    %v121 = vld [vmem:[#allocation6 + $0x50] sm:$0xff]
    %v122 = vld [vmem:[#allocation6 + $0x58] sm:$0xff]
    %v123 = vmul.f32 %v118, %v119
    %v124 = vmul.f32 %v117, %v120
    %v125 = vmul.f32 %v116, %v121
    %v126 = vmul.f32 %v115, %v122
    %127 = vst [vmem:[#allocation2 + $0x40] sm:$0xff] %v123
    %128 = vst [vmem:[#allocation2 + $0x48] sm:$0xff] %v124
    %129 = vst [vmem:[#allocation2 + $0x50] sm:$0xff] %v125
    %130 = vst [vmem:[#allocation2 + $0x58] sm:$0xff] %v126
    %131 = vrot.lane.b32.xlu0 %v50, 1
    %v132 = vpop.permute.xlu0 %131
    %133 = vrot.lane.b32.xlu0 %v51, 1
    %v134 = vpop.permute.xlu0 %133
    %135 = vrot.lane.b32.xlu0 %v52, 1
    %v136 = vpop.permute.xlu0 %135
    %137 = vrot.lane.b32.xlu0 %v53, 1
    %v138 = vpop.permute.xlu0 %137
    %vm139 = vcmp.lt.s32.totalorder %v63, 1
    %v140 = vsel %vm139, %v136, %v138
    %v141 = vsel %vm139, %v134, %v136
    %v142 = vsel %vm139, %v132, %v134
    %v143 = vsel %vm139, %v138, %v132
    %v144 = vld [vmem:[#allocation6 + $0x60] sm:$0xff]
    %v145 = vld [vmem:[#allocation6 + $0x68] sm:$0xff]
    %v146 = vld [vmem:[#allocation6 + $0x70] sm:$0xff]
    %v147 = vld [vmem:[#allocation6 + $0x78] sm:$0xff]
    %v148 = vmul.f32 %v143, %v144
    %v149 = vmul.f32 %v142, %v145
    %v150 = vmul.f32 %v141, %v146
    %v151 = vmul.f32 %v140, %v147
    %152 = vst [vmem:[#allocation2 + $0x60] sm:$0xff] %v148
    %153 = vst [vmem:[#allocation2 + $0x68] sm:$0xff] %v149
    %154 = vst [vmem:[#allocation2 + $0x70] sm:$0xff] %v150
    %155 = vst [vmem:[#allocation2 + $0x78] sm:$0xff] %v151
    %156 = vst [vmem:[#allocation2 + $0x80] sm:$0xff] %v50
    %157 = vst [vmem:[#allocation2 + $0x88] sm:$0xff] %v51
    %158 = vst [vmem:[#allocation2 + $0x90] sm:$0xff] %v52
    %159 = vst [vmem:[#allocation2 + $0x98] sm:$0xff] %v53
    %160 = vrot.lane.b32.xlu0 %v50, 127
    %v161 = vpop.permute.xlu0 %160
    %162 = vrot.lane.b32.xlu0 %v51, 127
    %v163 = vpop.permute.xlu0 %162
    %164 = vrot.lane.b32.xlu0 %v52, 127
    %v165 = vpop.permute.xlu0 %164
    %166 = vrot.lane.b32.xlu0 %v53, 127
    %v167 = vpop.permute.xlu0 %166
    %vm168 = vcmp.lt.s32.totalorder %v63, 127
    %v169 = vsel %vm168, %v165, %v167
    %v170 = vsel %vm168, %v163, %v165
    %v171 = vsel %vm168, %v161, %v163
    %v172 = vsel %vm168, %v167, %v161
    %v173 = vld [vmem:[#allocation6 + $0xa0] sm:$0xff]
    %v174 = vld [vmem:[#allocation6 + $0xa8] sm:$0xff]
    %v175 = vld [vmem:[#allocation6 + $0xb0] sm:$0xff]
    %v176 = vld [vmem:[#allocation6 + $0xb8] sm:$0xff]
    %v177 = vmul.f32 %v171, %v173
    %v178 = vmul.f32 %v170, %v174
    %v179 = vmul.f32 %v169, %v175
    %v180 = vmul.f32 %v172, %v176
    %181 = vst [vmem:[#allocation2 + $0xa0] sm:$0xff] %v177
    %182 = vst [vmem:[#allocation2 + $0xa8] sm:$0xff] %v178
    %183 = vst [vmem:[#allocation2 + $0xb0] sm:$0xff] %v179
    %184 = vst [vmem:[#allocation2 + $0xb8] sm:$0xff] %v180
    %185 = vrot.lane.b32.xlu0 %v50, 113
    %v186 = vpop.permute.xlu0 %185
    %187 = vrot.lane.b32.xlu0 %v51, 113
    %v188 = vpop.permute.xlu0 %187
    %189 = vrot.lane.b32.xlu0 %v52, 113
    %v190 = vpop.permute.xlu0 %189
    %191 = vrot.lane.b32.xlu0 %v53, 113
    %v192 = vpop.permute.xlu0 %191
    %vm193 = vcmp.lt.s32.totalorder %v63, 113
    %v194 = vsel %vm193, %v190, %v192
    %v195 = vsel %vm193, %v188, %v190
    %v196 = vsel %vm193, %v186, %v188
    %v197 = vsel %vm193, %v192, %v186
    %v198 = vld [vmem:[#allocation6 + $0xc0] sm:$0xff]
    %v199 = vld [vmem:[#allocation6 + $0xc8] sm:$0xff]
    %v200 = vld [vmem:[#allocation6 + $0xd0] sm:$0xff]
    %v201 = vld [vmem:[#allocation6 + $0xd8] sm:$0xff]
    %v202 = vmul.f32 %v196, %v198
    %v203 = vmul.f32 %v195, %v199
    %v204 = vmul.f32 %v194, %v200
    %v205 = vmul.f32 %v197, %v201
    %206 = vst [vmem:[#allocation2 + $0xc0] sm:$0xff] %v202
    %207 = vst [vmem:[#allocation2 + $0xc8] sm:$0xff] %v203
    %208 = vst [vmem:[#allocation2 + $0xd0] sm:$0xff] %v204
    %209 = vst [vmem:[#allocation2 + $0xd8] sm:$0xff] %v205
    %210 = vrot.lane.b32.xlu0 %v50, 112
    %v211 = vpop.permute.xlu0 %210
    %212 = vrot.lane.b32.xlu0 %v51, 112
    %v213 = vpop.permute.xlu0 %212
    %214 = vrot.lane.b32.xlu0 %v52, 112
    %v215 = vpop.permute.xlu0 %214
    %216 = vrot.lane.b32.xlu0 %v53, 112
    %v217 = vpop.permute.xlu0 %216
    %vm218 = vcmp.lt.s32.totalorder %v63, 112
    %v219 = vsel %vm218, %v215, %v217
    %v220 = vsel %vm218, %v213, %v215
    %v221 = vsel %vm218, %v211, %v213
    %v222 = vsel %vm218, %v217, %v211
    %v223 = vld [vmem:[#allocation6 + $0xe0] sm:$0xff]
    %v224 = vld [vmem:[#allocation6 + $0xe8] sm:$0xff]
    %v225 = vld [vmem:[#allocation6 + $0xf0] sm:$0xff]
    %v226 = vld [vmem:[#allocation6 + $0xf8] sm:$0xff]
    %v227 = vmul.f32 %v221, %v223
    %v228 = vmul.f32 %v220, %v224
    %v229 = vmul.f32 %v219, %v225
    %v230 = vmul.f32 %v222, %v226
    %231 = vst [vmem:[#allocation2 + $0xe0] sm:$0xff] %v227
    %232 = vst [vmem:[#allocation2 + $0xe8] sm:$0xff] %v228
    %233 = vst [vmem:[#allocation2 + $0xf0] sm:$0xff] %v229
    %234 = vst [vmem:[#allocation2 + $0xf8] sm:$0xff] %v230
    %235 = vrot.lane.b32.xlu0 %v50, 111
    %v236 = vpop.permute.xlu0 %235
    %237 = vrot.lane.b32.xlu0 %v51, 111
    %v238 = vpop.permute.xlu0 %237
    %239 = vrot.lane.b32.xlu0 %v52, 111
    %v240 = vpop.permute.xlu0 %239
    %241 = vrot.lane.b32.xlu0 %v53, 111
    %v242 = vpop.permute.xlu0 %241
    %vm243 = vcmp.lt.s32.totalorder %v63, 111
    %v244 = vsel %vm243, %v240, %v242
    %v245 = vsel %vm243, %v238, %v240
    %v246 = vsel %vm243, %v236, %v238
    %v247 = vsel %vm243, %v242, %v236
    %v248 = vld [vmem:[#allocation6 + $0x100] sm:$0xff]
    %v249 = vld [vmem:[#allocation6 + $0x108] sm:$0xff]
    %v250 = vld [vmem:[#allocation6 + $0x110] sm:$0xff]
    %v251 = vld [vmem:[#allocation6 + $0x118] sm:$0xff]
    %v252 = vmul.f32 %v246, %v248
    %v253 = vmul.f32 %v245, %v249
    %v254 = vmul.f32 %v244, %v250
    %v255 = vmul.f32 %v247, %v251
    %256 = vst [vmem:[#allocation2 + $0x100] sm:$0xff] %v252
    %257 = vst [vmem:[#allocation2 + $0x108] sm:$0xff] %v253
    %258 = vst [vmem:[#allocation2 + $0x110] sm:$0xff] %v254
    %259 = vst [vmem:[#allocation2 + $0x118] sm:$0xff] %v255
    %v260 = vld [vmem:[%s1] sm:$0xff]
    %v261 = vld [vmem:[#allocation2] sm:$0xff]
    %v262 = vld [vmem:[#allocation2 + $0x8] sm:$0xff]
    %v263 = vld [vmem:[#allocation2 + $0x10] sm:$0xff]
    %v264 = vld [vmem:[#allocation2 + $0x18] sm:$0xff]
    %v265 = vld [vmem:[#allocation2 + $0x20] sm:$0xff]
    %v266 = vld [vmem:[#allocation2 + $0x28] sm:$0xff]
    %v267 = vld [vmem:[#allocation2 + $0x30] sm:$0xff]
    %v268 = vld [vmem:[#allocation2 + $0x38] sm:$0xff]
    %v269 = vld [vmem:[#allocation2 + $0x40] sm:$0xff]
    %v270 = vld [vmem:[#allocation2 + $0x48] sm:$0xff]
    %v271 = vld [vmem:[#allocation2 + $0x50] sm:$0xff]
    %v272 = vld [vmem:[#allocation2 + $0x58] sm:$0xff]
    %v273 = vld [vmem:[#allocation2 + $0x60] sm:$0xff]
    %v274 = vld [vmem:[#allocation2 + $0x68] sm:$0xff]
    %v275 = vld [vmem:[#allocation2 + $0x70] sm:$0xff]
    %v276 = vld [vmem:[#allocation2 + $0x78] sm:$0xff]
    %v277 = vld [vmem:[#allocation2 + $0x80] sm:$0xff]
    %v278 = vld [vmem:[#allocation2 + $0x88] sm:$0xff]
    %v279 = vld [vmem:[#allocation2 + $0x90] sm:$0xff]
    %v280 = vld [vmem:[#allocation2 + $0x98] sm:$0xff]
    %v281 = vld [vmem:[#allocation2 + $0xa0] sm:$0xff]
    %v282 = vld [vmem:[#allocation2 + $0xa8] sm:$0xff]
    %v283 = vld [vmem:[#allocation2 + $0xb0] sm:$0xff]
    %v284 = vld [vmem:[#allocation2 + $0xb8] sm:$0xff]
    %v285 = vld [vmem:[#allocation2 + $0xc0] sm:$0xff]
    %v286 = vld [vmem:[#allocation2 + $0xc8] sm:$0xff]
    %v287 = vld [vmem:[#allocation2 + $0xd0] sm:$0xff]
    %v288 = vld [vmem:[#allocation2 + $0xd8] sm:$0xff]
    %v289 = vld [vmem:[#allocation2 + $0xe0] sm:$0xff]
    %v290 = vld [vmem:[#allocation2 + $0xe8] sm:$0xff]
    %v291 = vld [vmem:[#allocation2 + $0xf0] sm:$0xff]
    %v292 = vld [vmem:[#allocation2 + $0xf8] sm:$0xff]
    %v293 = vld [vmem:[#allocation2 + $0x100] sm:$0xff]
    %v294 = vld [vmem:[#allocation2 + $0x108] sm:$0xff]
    %v295 = vld [vmem:[#allocation2 + $0x110] sm:$0xff]
    %v296 = vld [vmem:[#allocation2 + $0x118] sm:$0xff]
    %v297 = vld [vmem:[%s2] sm:$0xff]
    %299 = vset.pattern.permute.xlu0 0
    %300 = vperm.xlu0 %299, %v297
    %v301 = vpop.permute.xlu0 %300
    %vm303 = vcmask 588800
    %v305 = vsel %vm303, %v260, 0
    %307 = vmatprep.subr.mxu0 %v262
    %308 = vmatpush1.msra.mxu0 %v261
    %309 = vmatprep.subr.mxu0 %v266
    %310 = vmatpush1.msra.mxu0 %v265
    %311 = vmatprep.subr.mxu0 %v270
    %312 = vmatpush1.msra.mxu0 %v269
    %313 = vmatprep.subr.mxu0 %v274
    %314 = vmatpush1.msra.mxu0 %v273
    %315 = vmatprep.subr.mxu0 %v278
    %316 = vmatpush1.msra.mxu0 %v277
    %317 = vmatprep.subr.mxu0 %v282
    %318 = vmatpush1.msra.mxu0 %v281
    %319 = vmatprep.subr.mxu0 %v286
    %320 = vmatpush1.msra.mxu0 %v285
    %321 = vmatprep.subr.mxu0 %v290
    %322 = vmatpush1.msra.mxu0 %v289
    %323 = vmatprep.subr.mxu0 %v294
    %324 = vmatpush1.msra.mxu0 %v293
    %325 = vmatprep.subr.mxu0 0.0
    %326 = vmatpush1.msra.mxu0 0.0
    %327 = vmatprep.subr.mxu0 0.0
    %328 = vmatpush1.msra.mxu0 0.0
    %329 = vmatprep.subr.mxu0 0.0
    %330 = vmatpush1.msra.mxu0 0.0
    %331 = vmatprep.subr.mxu0 0.0
    %332 = vmatpush1.msra.mxu0 0.0
    %333 = vmatprep.subr.mxu0 0.0
    %334 = vmatpush1.msra.mxu0 0.0
    %335 = vmatprep.subr.mxu0 0.0
    %336 = vmatpush1.msra.mxu0 0.0
    %337 = vmatprep.subr.mxu0 0.0
    %338 = vmatpush1.msra.mxu0 0.0
    %339 = vmatprep.subr.mxu0 0.0
    %340 = vmatpush1.msra.mxu0 0.0
    %341 = vmatprep.subr.mxu0 0.0
    %342 = vmatpush1.msra.mxu0 0.0
    %343 = vmatprep.subr.mxu0 0.0
    %344 = vmatpush1.msra.mxu0 0.0
    %345 = vmatprep.subr.mxu0 0.0
    %346 = vmatpush1.msra.mxu0 0.0
    %347 = vmatprep.subr.mxu0 0.0
    %348 = vmatpush1.msra.mxu0 0.0
    %349 = vmatprep.subr.mxu0 0.0
    %350 = vmatpush1.msra.mxu0 0.0
    %351 = vmatprep.subr.mxu0 0.0
    %352 = vmatpush1.msra.mxu0 0.0
    %353 = vmatprep.subr.mxu0 0.0
    %354 = vmatpush1.msra.mxu0 0.0
    %355 = vmatprep.subr.mxu0 0.0
    %356 = vmatpush1.msra.mxu0 0.0
    %357 = vmatprep.subr.mxu0 0.0
    %358 = vmatpush1.msra.mxu0 0.0
    %359 = vmatprep.subr.mxu0 0.0
    %360 = vmatpush1.msra.mxu0 0.0
    %361 = vmatprep.subr.mxu0 0.0
    %362 = vmatpush1.msra.mxu0 0.0
    %363 = vmatprep.subr.mxu0 0.0
    %364 = vmatpush1.msra.mxu0 0.0
    %365 = vmatprep.subr.mxu0 0.0
    %366 = vmatpush1.msra.mxu0 0.0
    %367 = vmatprep.subr.mxu0 0.0
    %368 = vmatpush1.msra.mxu0 0.0
    %369 = vmatprep.subr.mxu0 0.0
    %370 = vmatpush1.msra.mxu0 0.0
    %371 = vmatprep.mubr.f32.mxu0 0.0
    %372 = vmatmul.mubr.f32.gmra.mrb[0].mxu0 %v305
    %v373 = vpop.f32.mrb[0].mxu0
    %v374 = vadd.f32 %v301, %v373
    %v375 = vpop.f32.mrb[0].mxu0
    %v376 = vadd.f32 %v301, %v375
    %377 = vdwg.mxu0
    %378 = vmatprep.subr.mxu0 %v264
    %379 = vmatpush1.msra.mxu0 %v263
    %380 = vmatprep.subr.mxu0 %v268
    %381 = vmatpush1.msra.mxu0 %v267
    %382 = vmatprep.subr.mxu0 %v272
    %383 = vmatpush1.msra.mxu0 %v271
    %384 = vmatprep.subr.mxu0 %v276
    %385 = vmatpush1.msra.mxu0 %v275
    %386 = vmatprep.subr.mxu0 %v280
    %387 = vmatpush1.msra.mxu0 %v279
    %388 = vmatprep.subr.mxu0 %v284
    %389 = vmatpush1.msra.mxu0 %v283
    %390 = vmatprep.subr.mxu0 %v288
    %391 = vmatpush1.msra.mxu0 %v287
    %392 = vmatprep.subr.mxu0 %v292
    %393 = vmatpush1.msra.mxu0 %v291
    %394 = vmatprep.subr.mxu0 %v296
    %395 = vmatpush1.msra.mxu0 %v295
    %396 = vmatprep.subr.mxu0 0.0
    %397 = vmatpush1.msra.mxu0 0.0
    %398 = vmatprep.subr.mxu0 0.0
    %399 = vmatpush1.msra.mxu0 0.0
    %400 = vmatprep.subr.mxu0 0.0
    %401 = vmatpush1.msra.mxu0 0.0
    %402 = vmatprep.subr.mxu0 0.0
    %403 = vmatpush1.msra.mxu0 0.0
    %404 = vmatprep.subr.mxu0 0.0
    %405 = vmatpush1.msra.mxu0 0.0
    %406 = vmatprep.subr.mxu0 0.0
    %407 = vmatpush1.msra.mxu0 0.0
    %408 = vmatprep.subr.mxu0 0.0
    %409 = vmatpush1.msra.mxu0 0.0
    %410 = vmatprep.subr.mxu0 0.0
    %411 = vmatpush1.msra.mxu0 0.0
    %412 = vmatprep.subr.mxu0 0.0
    %413 = vmatpush1.msra.mxu0 0.0
    %414 = vmatprep.subr.mxu0 0.0
    %415 = vmatpush1.msra.mxu0 0.0
    %416 = vmatprep.subr.mxu0 0.0
    %417 = vmatpush1.msra.mxu0 0.0
    %418 = vmatprep.subr.mxu0 0.0
    %419 = vmatpush1.msra.mxu0 0.0
    %420 = vmatprep.subr.mxu0 0.0
    %421 = vmatpush1.msra.mxu0 0.0
    %422 = vmatprep.subr.mxu0 0.0
    %423 = vmatpush1.msra.mxu0 0.0
    %424 = vmatprep.subr.mxu0 0.0
    %425 = vmatpush1.msra.mxu0 0.0
    %426 = vmatprep.subr.mxu0 0.0
    %427 = vmatpush1.msra.mxu0 0.0
    %428 = vmatprep.subr.mxu0 0.0
    %429 = vmatpush1.msra.mxu0 0.0
    %430 = vmatprep.subr.mxu0 0.0
    %431 = vmatpush1.msra.mxu0 0.0
    %432 = vmatprep.subr.mxu0 0.0
    %433 = vmatpush1.msra.mxu0 0.0
    %434 = vmatprep.subr.mxu0 0.0
    %435 = vmatpush1.msra.mxu0 0.0
    %436 = vmatprep.subr.mxu0 0.0
    %437 = vmatpush1.msra.mxu0 0.0
    %438 = vmatprep.subr.mxu0 0.0
    %439 = vmatpush1.msra.mxu0 0.0
    %440 = vmatprep.subr.mxu0 0.0
    %441 = vmatpush1.msra.mxu0 0.0
    %442 = vmatprep.mubr.f32.mxu0 0.0
    %443 = vmatmul.mubr.f32.gmra.mrb[0].mxu0 %v305
    %v444 = vpop.f32.mrb[0].mxu0
    %v445 = vadd.f32 %v301, %v444
    %v446 = vpop.f32.mrb[0].mxu0
    %v447 = vadd.f32 %v301, %v446
    %448 = vdwg.mxu0
    %v449 = vmax.f32 %v374, 0.0
    %v450 = vmax.f32 %v376, 0.0
    %v451 = vmax.f32 %v445, 0.0
    %v452 = vmax.f32 %v447, 0.0
    %453 = vrot.lane.b32.xlu0 %v449, 17
    %v454 = vpop.permute.xlu0 %453
    %455 = vrot.lane.b32.xlu0 %v450, 17
    %v456 = vpop.permute.xlu0 %455
    %457 = vrot.lane.b32.xlu0 %v451, 17
    %v458 = vpop.permute.xlu0 %457
    %459 = vrot.lane.b32.xlu0 %v452, 17
    %v460 = vpop.permute.xlu0 %459
    %v461 = vsel %vm64, %v458, %v460
    %v462 = vsel %vm64, %v456, %v458
    %v463 = vsel %vm64, %v454, %v456
    %v464 = vsel %vm64, %v460, %v454
    %v465 = vld [vmem:[#allocation6] sm:$0xff]
    %v466 = vld [vmem:[#allocation6 + $0x8] sm:$0xff]
    %v467 = vld [vmem:[#allocation6 + $0x10] sm:$0xff]
    %v468 = vld [vmem:[#allocation6 + $0x18] sm:$0xff]
    %v469 = vmul.f32 %v464, %v465
    %v470 = vmul.f32 %v463, %v466
    %v471 = vmul.f32 %v462, %v467
    %v472 = vmul.f32 %v461, %v468
    %473 = vst [vmem:[#allocation2] sm:$0xff] %v469
    %474 = vst [vmem:[#allocation2 + $0x8] sm:$0xff] %v470
    %475 = vst [vmem:[#allocation2 + $0x10] sm:$0xff] %v471
    %476 = vst [vmem:[#allocation2 + $0x18] sm:$0xff] %v472
    %477 = vrot.lane.b32.xlu0 %v449, 16
    %v478 = vpop.permute.xlu0 %477
    %479 = vrot.lane.b32.xlu0 %v450, 16
    %v480 = vpop.permute.xlu0 %479
    %481 = vrot.lane.b32.xlu0 %v451, 16
    %v482 = vpop.permute.xlu0 %481
    %483 = vrot.lane.b32.xlu0 %v452, 16
    %v484 = vpop.permute.xlu0 %483
    %v485 = vsel %vm89, %v482, %v484
    %v486 = vsel %vm89, %v480, %v482
    %v487 = vsel %vm89, %v478, %v480
    %v488 = vsel %vm89, %v484, %v478
    %v489 = vld [vmem:[#allocation6 + $0x20] sm:$0xff]
    %v490 = vld [vmem:[#allocation6 + $0x28] sm:$0xff]
    %v491 = vld [vmem:[#allocation6 + $0x30] sm:$0xff]
    %v492 = vld [vmem:[#allocation6 + $0x38] sm:$0xff]
    %v493 = vmul.f32 %v488, %v489
    %v494 = vmul.f32 %v487, %v490
    %v495 = vmul.f32 %v486, %v491
    %v496 = vmul.f32 %v485, %v492
    %497 = vst [vmem:[#allocation2 + $0x20] sm:$0xff] %v493
    %498 = vst [vmem:[#allocation2 + $0x28] sm:$0xff] %v494
    %499 = vst [vmem:[#allocation2 + $0x30] sm:$0xff] %v495
    %500 = vst [vmem:[#allocation2 + $0x38] sm:$0xff] %v496
    %501 = vrot.lane.b32.xlu0 %v449, 15
    %v502 = vpop.permute.xlu0 %501
    %503 = vrot.lane.b32.xlu0 %v450, 15
    %v504 = vpop.permute.xlu0 %503
    %505 = vrot.lane.b32.xlu0 %v451, 15
    %v506 = vpop.permute.xlu0 %505
    %507 = vrot.lane.b32.xlu0 %v452, 15
    %v508 = vpop.permute.xlu0 %507
    %v509 = vsel %vm114, %v506, %v508
    %v510 = vsel %vm114, %v504, %v506
    %v511 = vsel %vm114, %v502, %v504
    %v512 = vsel %vm114, %v508, %v502
    %v513 = vld [vmem:[#allocation6 + $0x40] sm:$0xff]
    %v514 = vld [vmem:[#allocation6 + $0x48] sm:$0xff]
    %v515 = vld [vmem:[#allocation6 + $0x50] sm:$0xff]
    %v516 = vld [vmem:[#allocation6 + $0x58] sm:$0xff]
    %v517 = vmul.f32 %v512, %v513
    %v518 = vmul.f32 %v511, %v514
    %v519 = vmul.f32 %v510, %v515
    %v520 = vmul.f32 %v509, %v516
    %521 = vst [vmem:[#allocation2 + $0x40] sm:$0xff] %v517
    %522 = vst [vmem:[#allocation2 + $0x48] sm:$0xff] %v518
    %523 = vst [vmem:[#allocation2 + $0x50] sm:$0xff] %v519
    %524 = vst [vmem:[#allocation2 + $0x58] sm:$0xff] %v520
    %525 = vrot.lane.b32.xlu0 %v449, 1
    %v526 = vpop.permute.xlu0 %525
    %527 = vrot.lane.b32.xlu0 %v450, 1
    %v528 = vpop.permute.xlu0 %527
    %529 = vrot.lane.b32.xlu0 %v451, 1
    %v530 = vpop.permute.xlu0 %529
    %531 = vrot.lane.b32.xlu0 %v452, 1
    %v532 = vpop.permute.xlu0 %531
    %v533 = vsel %vm139, %v530, %v532
    %v534 = vsel %vm139, %v528, %v530
    %v535 = vsel %vm139, %v526, %v528
    %v536 = vsel %vm139, %v532, %v526
    %v537 = vld [vmem:[#allocation6 + $0x60] sm:$0xff]
    %v538 = vld [vmem:[#allocation6 + $0x68] sm:$0xff]
    %v539 = vld [vmem:[#allocation6 + $0x70] sm:$0xff]
    %v540 = vld [vmem:[#allocation6 + $0x78] sm:$0xff]
    %v541 = vmul.f32 %v536, %v537
    %v542 = vmul.f32 %v535, %v538
    %v543 = vmul.f32 %v534, %v539
    %v544 = vmul.f32 %v533, %v540
    %545 = vst [vmem:[#allocation2 + $0x60] sm:$0xff] %v541
    %546 = vst [vmem:[#allocation2 + $0x68] sm:$0xff] %v542
    %547 = vst [vmem:[#allocation2 + $0x70] sm:$0xff] %v543
    %548 = vst [vmem:[#allocation2 + $0x78] sm:$0xff] %v544
    %549 = vst [vmem:[#allocation2 + $0x80] sm:$0xff] %v449
    %550 = vst [vmem:[#allocation2 + $0x88] sm:$0xff] %v450
    %551 = vst [vmem:[#allocation2 + $0x90] sm:$0xff] %v451
    %552 = vst [vmem:[#allocation2 + $0x98] sm:$0xff] %v452
    %553 = vrot.lane.b32.xlu0 %v449, 127
    %v554 = vpop.permute.xlu0 %553
    %555 = vrot.lane.b32.xlu0 %v450, 127
    %v556 = vpop.permute.xlu0 %555
    %557 = vrot.lane.b32.xlu0 %v451, 127
    %v558 = vpop.permute.xlu0 %557
    %559 = vrot.lane.b32.xlu0 %v452, 127
    %v560 = vpop.permute.xlu0 %559
    %v561 = vsel %vm168, %v558, %v560
    %v562 = vsel %vm168, %v556, %v558
    %v563 = vsel %vm168, %v554, %v556
    %v564 = vsel %vm168, %v560, %v554
    %v565 = vld [vmem:[#allocation6 + $0xa0] sm:$0xff]
    %v566 = vld [vmem:[#allocation6 + $0xa8] sm:$0xff]
    %v567 = vld [vmem:[#allocation6 + $0xb0] sm:$0xff]
    %v568 = vld [vmem:[#allocation6 + $0xb8] sm:$0xff]
    %v569 = vmul.f32 %v563, %v565
    %v570 = vmul.f32 %v562, %v566
    %v571 = vmul.f32 %v561, %v567
    %v572 = vmul.f32 %v564, %v568
    %573 = vst [vmem:[#allocation2 + $0xa0] sm:$0xff] %v569
    %574 = vst [vmem:[#allocation2 + $0xa8] sm:$0xff] %v570
    %575 = vst [vmem:[#allocation2 + $0xb0] sm:$0xff] %v571
    %576 = vst [vmem:[#allocation2 + $0xb8] sm:$0xff] %v572
    %577 = vrot.lane.b32.xlu0 %v449, 113
    %v578 = vpop.permute.xlu0 %577
    %579 = vrot.lane.b32.xlu0 %v450, 113
    %v580 = vpop.permute.xlu0 %579
    %581 = vrot.lane.b32.xlu0 %v451, 113
    %v582 = vpop.permute.xlu0 %581
    %583 = vrot.lane.b32.xlu0 %v452, 113
    %v584 = vpop.permute.xlu0 %583
    %v585 = vsel %vm193, %v582, %v584
    %v586 = vsel %vm193, %v580, %v582
    %v587 = vsel %vm193, %v578, %v580
    %v588 = vsel %vm193, %v584, %v578
    %v589 = vld [vmem:[#allocation6 + $0xc0] sm:$0xff]
    %v590 = vld [vmem:[#allocation6 + $0xc8] sm:$0xff]
    %v591 = vld [vmem:[#allocation6 + $0xd0] sm:$0xff]
    %v592 = vld [vmem:[#allocation6 + $0xd8] sm:$0xff]
    %v593 = vmul.f32 %v587, %v589
    %v594 = vmul.f32 %v586, %v590
    %v595 = vmul.f32 %v585, %v591
    %v596 = vmul.f32 %v588, %v592
    %597 = vst [vmem:[#allocation2 + $0xc0] sm:$0xff] %v593
    %598 = vst [vmem:[#allocation2 + $0xc8] sm:$0xff] %v594
    %599 = vst [vmem:[#allocation2 + $0xd0] sm:$0xff] %v595
    %600 = vst [vmem:[#allocation2 + $0xd8] sm:$0xff] %v596
    %601 = vrot.lane.b32.xlu0 %v449, 112
    %v602 = vpop.permute.xlu0 %601
    %603 = vrot.lane.b32.xlu0 %v450, 112
    %v604 = vpop.permute.xlu0 %603
    %605 = vrot.lane.b32.xlu0 %v451, 112
    %v606 = vpop.permute.xlu0 %605
    %607 = vrot.lane.b32.xlu0 %v452, 112
    %v608 = vpop.permute.xlu0 %607
    %v609 = vsel %vm218, %v606, %v608
    %v610 = vsel %vm218, %v604, %v606
    %v611 = vsel %vm218, %v602, %v604
    %v612 = vsel %vm218, %v608, %v602
    %v613 = vld [vmem:[#allocation6 + $0xe0] sm:$0xff]
    %v614 = vld [vmem:[#allocation6 + $0xe8] sm:$0xff]
    %v615 = vld [vmem:[#allocation6 + $0xf0] sm:$0xff]
    %v616 = vld [vmem:[#allocation6 + $0xf8] sm:$0xff]
    %v617 = vmul.f32 %v611, %v613
    %v618 = vmul.f32 %v610, %v614
    %v619 = vmul.f32 %v609, %v615
    %v620 = vmul.f32 %v612, %v616
    %621 = vst [vmem:[#allocation2 + $0xe0] sm:$0xff] %v617
    %622 = vst [vmem:[#allocation2 + $0xe8] sm:$0xff] %v618
    %623 = vst [vmem:[#allocation2 + $0xf0] sm:$0xff] %v619
    %624 = vst [vmem:[#allocation2 + $0xf8] sm:$0xff] %v620
    %625 = vrot.lane.b32.xlu0 %v449, 111
    %v626 = vpop.permute.xlu0 %625
    %627 = vrot.lane.b32.xlu0 %v450, 111
    %v628 = vpop.permute.xlu0 %627
    %629 = vrot.lane.b32.xlu0 %v451, 111
    %v630 = vpop.permute.xlu0 %629
    %631 = vrot.lane.b32.xlu0 %v452, 111
    %v632 = vpop.permute.xlu0 %631
    %v633 = vsel %vm243, %v630, %v632
    %v634 = vsel %vm243, %v628, %v630
    %v635 = vsel %vm243, %v626, %v628
    %v636 = vsel %vm243, %v632, %v626
    %v637 = vld [vmem:[#allocation6 + $0x100] sm:$0xff]
    %v638 = vld [vmem:[#allocation6 + $0x108] sm:$0xff]
    %v639 = vld [vmem:[#allocation6 + $0x110] sm:$0xff]
    %v640 = vld [vmem:[#allocation6 + $0x118] sm:$0xff]
    %v641 = vmul.f32 %v635, %v637
    %v642 = vmul.f32 %v634, %v638
    %v643 = vmul.f32 %v633, %v639
    %v644 = vmul.f32 %v636, %v640
    %645 = vst [vmem:[#allocation2 + $0x100] sm:$0xff] %v641
    %646 = vst [vmem:[#allocation2 + $0x108] sm:$0xff] %v642
    %647 = vst [vmem:[#allocation2 + $0x110] sm:$0xff] %v643
    %648 = vst [vmem:[#allocation2 + $0x118] sm:$0xff] %v644
    %v649 = vld [vmem:[%s3] sm:$0xff]
    %v650 = vld [vmem:[#allocation2] sm:$0xff]
    %v651 = vld [vmem:[#allocation2 + $0x8] sm:$0xff]
    %v652 = vld [vmem:[#allocation2 + $0x10] sm:$0xff]
    %v653 = vld [vmem:[#allocation2 + $0x18] sm:$0xff]
    %v654 = vld [vmem:[#allocation2 + $0x20] sm:$0xff]
    %v655 = vld [vmem:[#allocation2 + $0x28] sm:$0xff]
    %v656 = vld [vmem:[#allocation2 + $0x30] sm:$0xff]
    %v657 = vld [vmem:[#allocation2 + $0x38] sm:$0xff]
    %v658 = vld [vmem:[#allocation2 + $0x40] sm:$0xff]
    %v659 = vld [vmem:[#allocation2 + $0x48] sm:$0xff]
    %v660 = vld [vmem:[#allocation2 + $0x50] sm:$0xff]
    %v661 = vld [vmem:[#allocation2 + $0x58] sm:$0xff]
    %v662 = vld [vmem:[#allocation2 + $0x60] sm:$0xff]
    %v663 = vld [vmem:[#allocation2 + $0x68] sm:$0xff]
    %v664 = vld [vmem:[#allocation2 + $0x70] sm:$0xff]
    %v665 = vld [vmem:[#allocation2 + $0x78] sm:$0xff]
    %v666 = vld [vmem:[#allocation2 + $0x80] sm:$0xff]
    %v667 = vld [vmem:[#allocation2 + $0x88] sm:$0xff]
    %v668 = vld [vmem:[#allocation2 + $0x90] sm:$0xff]
    %v669 = vld [vmem:[#allocation2 + $0x98] sm:$0xff]
    %v670 = vld [vmem:[#allocation2 + $0xa0] sm:$0xff]
    %v671 = vld [vmem:[#allocation2 + $0xa8] sm:$0xff]
    %v672 = vld [vmem:[#allocation2 + $0xb0] sm:$0xff]
    %v673 = vld [vmem:[#allocation2 + $0xb8] sm:$0xff]
    %v674 = vld [vmem:[#allocation2 + $0xc0] sm:$0xff]
    %v675 = vld [vmem:[#allocation2 + $0xc8] sm:$0xff]
    %v676 = vld [vmem:[#allocation2 + $0xd0] sm:$0xff]
    %v677 = vld [vmem:[#allocation2 + $0xd8] sm:$0xff]
    %v678 = vld [vmem:[#allocation2 + $0xe0] sm:$0xff]
    %v679 = vld [vmem:[#allocation2 + $0xe8] sm:$0xff]
    %v680 = vld [vmem:[#allocation2 + $0xf0] sm:$0xff]
    %v681 = vld [vmem:[#allocation2 + $0xf8] sm:$0xff]
    %v682 = vld [vmem:[#allocation2 + $0x100] sm:$0xff]
    %v683 = vld [vmem:[#allocation2 + $0x108] sm:$0xff]
    %v684 = vld [vmem:[#allocation2 + $0x110] sm:$0xff]
    %v685 = vld [vmem:[#allocation2 + $0x118] sm:$0xff]
    %v686 = vld [vmem:[%s4] sm:$0xff]
    %688 = vset.pattern.permute.xlu0 0
    %689 = vperm.xlu0 %688, %v686
    %v690 = vpop.permute.xlu0 %689
    %v693 = vsel %vm303, %v649, 0
    %695 = vmatprep.subr.mxu0 %v651
    %696 = vmatpush1.msra.mxu0 %v650
    %697 = vmatprep.subr.mxu0 %v655
    %698 = vmatpush1.msra.mxu0 %v654
    %699 = vmatprep.subr.mxu0 %v659
    %700 = vmatpush1.msra.mxu0 %v658
    %701 = vmatprep.subr.mxu0 %v663
    %702 = vmatpush1.msra.mxu0 %v662
    %703 = vmatprep.subr.mxu0 %v667
    %704 = vmatpush1.msra.mxu0 %v666
    %705 = vmatprep.subr.mxu0 %v671
    %706 = vmatpush1.msra.mxu0 %v670
    %707 = vmatprep.subr.mxu0 %v675
    %708 = vmatpush1.msra.mxu0 %v674
    %709 = vmatprep.subr.mxu0 %v679
    %710 = vmatpush1.msra.mxu0 %v678
    %711 = vmatprep.subr.mxu0 %v683
    %712 = vmatpush1.msra.mxu0 %v682
    %713 = vmatprep.subr.mxu0 0.0
    %714 = vmatpush1.msra.mxu0 0.0
    %715 = vmatprep.subr.mxu0 0.0
    %716 = vmatpush1.msra.mxu0 0.0
    %717 = vmatprep.subr.mxu0 0.0
    %718 = vmatpush1.msra.mxu0 0.0
    %719 = vmatprep.subr.mxu0 0.0
    %720 = vmatpush1.msra.mxu0 0.0
    %721 = vmatprep.subr.mxu0 0.0
    %722 = vmatpush1.msra.mxu0 0.0
    %723 = vmatprep.subr.mxu0 0.0
    %724 = vmatpush1.msra.mxu0 0.0
    %725 = vmatprep.subr.mxu0 0.0
    %726 = vmatpush1.msra.mxu0 0.0
    %727 = vmatprep.subr.mxu0 0.0
    %728 = vmatpush1.msra.mxu0 0.0
    %729 = vmatprep.subr.mxu0 0.0
    %730 = vmatpush1.msra.mxu0 0.0
    %731 = vmatprep.subr.mxu0 0.0
    %732 = vmatpush1.msra.mxu0 0.0
    %733 = vmatprep.subr.mxu0 0.0
    %734 = vmatpush1.msra.mxu0 0.0
    %735 = vmatprep.subr.mxu0 0.0
    %736 = vmatpush1.msra.mxu0 0.0
    %737 = vmatprep.subr.mxu0 0.0
    %738 = vmatpush1.msra.mxu0 0.0
    %739 = vmatprep.subr.mxu0 0.0
    %740 = vmatpush1.msra.mxu0 0.0
    %741 = vmatprep.subr.mxu0 0.0
    %742 = vmatpush1.msra.mxu0 0.0
    %743 = vmatprep.subr.mxu0 0.0
    %744 = vmatpush1.msra.mxu0 0.0
    %745 = vmatprep.subr.mxu0 0.0
    %746 = vmatpush1.msra.mxu0 0.0
    %747 = vmatprep.subr.mxu0 0.0
    %748 = vmatpush1.msra.mxu0 0.0
    %749 = vmatprep.subr.mxu0 0.0
    %750 = vmatpush1.msra.mxu0 0.0
    %751 = vmatprep.subr.mxu0 0.0
    %752 = vmatpush1.msra.mxu0 0.0
    %753 = vmatprep.subr.mxu0 0.0
    %754 = vmatpush1.msra.mxu0 0.0
    %755 = vmatprep.subr.mxu0 0.0
    %756 = vmatpush1.msra.mxu0 0.0
    %757 = vmatprep.subr.mxu0 0.0
    %758 = vmatpush1.msra.mxu0 0.0
    %759 = vmatprep.mubr.f32.mxu0 0.0
    %760 = vmatmul.mubr.f32.gmra.mrb[0].mxu0 %v693
    %v761 = vpop.f32.mrb[0].mxu0
    %v762 = vadd.f32 %v690, %v761
    %v763 = vpop.f32.mrb[0].mxu0
    %v764 = vadd.f32 %v690, %v763
    %765 = vdwg.mxu0
    %766 = vmatprep.subr.mxu0 %v653
    %767 = vmatpush1.msra.mxu0 %v652
    %768 = vmatprep.subr.mxu0 %v657
    %769 = vmatpush1.msra.mxu0 %v656
    %770 = vmatprep.subr.mxu0 %v661
    %771 = vmatpush1.msra.mxu0 %v660
    %772 = vmatprep.subr.mxu0 %v665
    %773 = vmatpush1.msra.mxu0 %v664
    %774 = vmatprep.subr.mxu0 %v669
    %775 = vmatpush1.msra.mxu0 %v668
    %776 = vmatprep.subr.mxu0 %v673
    %777 = vmatpush1.msra.mxu0 %v672
    %778 = vmatprep.subr.mxu0 %v677
    %779 = vmatpush1.msra.mxu0 %v676
    %780 = vmatprep.subr.mxu0 %v681
    %781 = vmatpush1.msra.mxu0 %v680
    %782 = vmatprep.subr.mxu0 %v685
    %783 = vmatpush1.msra.mxu0 %v684
    %784 = vmatprep.subr.mxu0 0.0
    %785 = vmatpush1.msra.mxu0 0.0
    %786 = vmatprep.subr.mxu0 0.0
    %787 = vmatpush1.msra.mxu0 0.0
    %788 = vmatprep.subr.mxu0 0.0
    %789 = vmatpush1.msra.mxu0 0.0
    %790 = vmatprep.subr.mxu0 0.0
    %791 = vmatpush1.msra.mxu0 0.0
    %792 = vmatprep.subr.mxu0 0.0
    %793 = vmatpush1.msra.mxu0 0.0
    %794 = vmatprep.subr.mxu0 0.0
    %795 = vmatpush1.msra.mxu0 0.0
    %796 = vmatprep.subr.mxu0 0.0
    %797 = vmatpush1.msra.mxu0 0.0
    %798 = vmatprep.subr.mxu0 0.0
    %799 = vmatpush1.msra.mxu0 0.0
    %800 = vmatprep.subr.mxu0 0.0
    %801 = vmatpush1.msra.mxu0 0.0
    %802 = vmatprep.subr.mxu0 0.0
    %803 = vmatpush1.msra.mxu0 0.0
    %804 = vmatprep.subr.mxu0 0.0
    %805 = vmatpush1.msra.mxu0 0.0
    %806 = vmatprep.subr.mxu0 0.0
    %807 = vmatpush1.msra.mxu0 0.0
    %808 = vmatprep.subr.mxu0 0.0
    %809 = vmatpush1.msra.mxu0 0.0
    %810 = vmatprep.subr.mxu0 0.0
    %811 = vmatpush1.msra.mxu0 0.0
    %812 = vmatprep.subr.mxu0 0.0
    %813 = vmatpush1.msra.mxu0 0.0
    %814 = vmatprep.subr.mxu0 0.0
    %815 = vmatpush1.msra.mxu0 0.0
    %816 = vmatprep.subr.mxu0 0.0
    %817 = vmatpush1.msra.mxu0 0.0
    %818 = vmatprep.subr.mxu0 0.0
    %819 = vmatpush1.msra.mxu0 0.0
    %820 = vmatprep.subr.mxu0 0.0
    %821 = vmatpush1.msra.mxu0 0.0
    %822 = vmatprep.subr.mxu0 0.0
    %823 = vmatpush1.msra.mxu0 0.0
    %824 = vmatprep.subr.mxu0 0.0
    %825 = vmatpush1.msra.mxu0 0.0
    %826 = vmatprep.subr.mxu0 0.0
    %827 = vmatpush1.msra.mxu0 0.0
    %828 = vmatprep.subr.mxu0 0.0
    %829 = vmatpush1.msra.mxu0 0.0
    %830 = vmatprep.mubr.f32.mxu0 0.0
    %831 = vmatmul.mubr.f32.gmra.mrb[0].mxu0 %v693
    %v832 = vpop.f32.mrb[0].mxu0
    %v833 = vadd.f32 %v690, %v832
    %v834 = vpop.f32.mrb[0].mxu0
    %v835 = vadd.f32 %v690, %v834
    %836 = vdwg.mxu0
    %v837 = vmax.f32 %v762, 0.0
    %v838 = vmax.f32 %v764, 0.0
    %v839 = vmax.f32 %v833, 0.0
    %v840 = vmax.f32 %v835, 0.0
    %841 = vst [vmem:[#allocation8] sm:$0xff] %v837
    %842 = vst [vmem:[#allocation8 + $0x8] sm:$0xff] %v838
    %843 = vst [vmem:[#allocation8 + $0x10] sm:$0xff] %v839
    %844 = vst [vmem:[#allocation8 + $0x18] sm:$0xff] %v840
    // Predicated region
    $region34: #{tpu_custom_call.1} parent=1 // pred_check
      _
    $region35: #{tpu_custom_call.1} parent=1 // pred_check_branch
      %846 = sbr.rel (0) target = $region37
    $region36: #{tpu_custom_call.1} parent=1 // pred_region
      %s848 = ssub.s32 512, 512
      %849 = vsyncadd [#allocation5], %s848
      %s851 = sshll.u32 [#allocation8], 4
      %s852 = int_to_ptr.vmem [resolvable:$true] %s851
      %854 = dma.vmem_to_hbm [thread:$0]  %s852, 512, %s6, [#allocation5]
    $region37: #{tpu_custom_call.1} parent=1 // pred_fallthru
      _
    // Predicated region
    $region38: #{tpu_custom_call.1} parent=1 // pred_check
      _
    $region39: #{tpu_custom_call.1} parent=1 // pred_check_branch
      %856 = sbr.rel (0) target = $region41
    $region40: #{tpu_custom_call.1} parent=1 // pred_region
      %857 = dma.done [#allocation5], 512
    $region41: #{tpu_custom_call.1} parent=1 // pred_fallthru
      _
    %858 = vsyncpa [#allocation4], 1
    %859 = vsyncpa [#allocation7], 1
    %860 = vsyncpa [#allocation5], 1

</llo_original>
